<compile_context>
chip_gen: v7x
topology: tpu7x:2x2x1
jax: 0.10.0
libtpu: 0.0.40
codegen_flags: <defaults>
</compile_context>

<pallas_src>
import functools

import jax
import jax.numpy as jnp
from jax.experimental import pallas as pl
from jax.experimental.pallas import tpu as pltpu


def _round_up(n, m):
    return ((n + m - 1) // m) * m


def policy_net_kernel(x_ref, w1_ref, b1_ref, w2_ref, b2_ref, out_ref):
    # Cast x f32 -> bf16 on the VPU (hidden under the DMA/MXU); f32 accumulate.
    x = x_ref[...].astype(jnp.bfloat16)
    h = jnp.dot(x, w1_ref[...], preferred_element_type=jnp.float32)
    h = jnp.maximum(h + b1_ref[...], 0.0)                     # (TB, H) f32

    # fc2 logits on a 128-lane padded action axis; padded lanes have zero
    # weight columns and a -1e30 f32 bias, so exp() maps them to exactly 0.
    logits = jnp.dot(h.astype(jnp.bfloat16), w2_ref[...],
                     preferred_element_type=jnp.float32)
    logits = logits + b2_ref[...]                             # (TB, A_pad) f32

    # Numerically stable softmax; exact divide (probs feed PPO sampling /
    # log-prob ratios) -- the divide is off the critical path.
    m = jnp.max(logits, axis=-1, keepdims=True)
    e = jnp.exp(logits - m)
    denom = jnp.sum(e, axis=-1, keepdims=True)
    probs = e / denom

    # Narrow store: only the real action lanes go back to HBM.
    out_ref[...] = probs[:, : out_ref.shape[-1]].astype(out_ref.dtype)


def prepare_policy_params(w1, b1, w2, b2):
    """One-time weight preprocessing (pad + bf16 cast). Call once, reuse."""
    S, H = w1.shape
    A = w2.shape[1]
    A_pad = _round_up(max(A, 128), 128)
    w1_bf = w1.astype(jnp.bfloat16)                                  # (S, H)
    b1_f = b1.reshape(1, H).astype(jnp.float32)                      # (1, H)
    w2_bf = (jnp.zeros((H, A_pad), jnp.float32).at[:, :A].set(w2)
             .astype(jnp.bfloat16))                                  # (H, A_pad)
    b2_f = (jnp.full((1, A_pad), -1e30, jnp.float32)                 # keep f32!
            .at[0, :A].set(b2.astype(jnp.float32)))                  # (1, A_pad)
    return (w1_bf, b1_f, w2_bf, b2_f)


@functools.partial(jax.jit, static_argnames=("action_dim", "tb"))
def policy_net_forward(x, params, *, action_dim, tb=1024):
    """x: (B, state_dim) f32; params from prepare_policy_params().
    Returns (B, action_dim) softmax probabilities (f32)."""
    w1_bf, b1_f, w2_bf, b2_f = params
    B, S = x.shape
    H = w1_bf.shape[1]
    A_pad = w2_bf.shape[1]
    A = action_dim

    # Balanced batch tiling: bounded padding overshoot, TB multiple of 16.
    n_tiles = pl.cdiv(B, tb)
    TB = _round_up(pl.cdiv(B, n_tiles), 16)
    B_pad = n_tiles * TB
    if B_pad != B:
        x = jnp.pad(x, ((0, B_pad - B), (0, 0)))

    # VMEM budget: double-buffered streamed tiles + pinned weights + live f32
    # intermediates, with 2x headroom; cap well below v7x's 64 MiB physical.
    pinned = 2 * ((S * H + H * A_pad) * 2 + (H + A_pad) * 4)
    streamed = 2 * (TB * S * 4 + TB * A * 4)
    live = TB * (S * 2 + H * 4 + 2 * A_pad * 4)
    vmem_limit = int(min(max(2 * (pinned + streamed + live), 16 << 20), 48 << 20))

    out = pl.pallas_call(
        policy_net_kernel,
        out_shape=jax.ShapeDtypeStruct((B_pad, A), jnp.float32),
        grid=(n_tiles,),
        in_specs=[
            pl.BlockSpec((TB, S), lambda i: (i, 0)),       # x: streamed f32 per tile
            pl.BlockSpec((S, H), lambda i: (0, 0)),        # w1: pinned (bf16)
            pl.BlockSpec((1, H), lambda i: (0, 0)),        # b1: pinned (f32)
            pl.BlockSpec((H, A_pad), lambda i: (0, 0)),    # w2: pinned (bf16, padded)
            pl.BlockSpec((1, A_pad), lambda i: (0, 0)),    # b2: pinned (f32, -1e30 pads)
        ],
        out_specs=pl.BlockSpec((TB, A), lambda i: (i, 0)), # narrow f32 writeback
        compiler_params=pltpu.CompilerParams(
            # TODO(synk): on v7x, use pltpu.CORE_PARALLEL on this axis to split
            # batch tiles across the 2 TensorCores.
            dimension_semantics=("parallel",),
            vmem_limit_bytes=vmem_limit,
        ),
    )(x, w1_bf, b1_f, w2_bf, b2_f)

    if B_pad != B:
        out = out[:B]
    return out


def _reference(x, w1, b1, w2, b2):
    h = jnp.maximum(x @ w1 + b1, 0.0)
    return jax.nn.softmax(h @ w2 + b2, axis=1)


if __name__ == "__main__":
    # Small shapes consistent with the module's forward.
    batch, state_dim, hidden_dim, action_dim = 8, 16, 32, 4

    key = jax.random.PRNGKey(0)
    kx, kw1, kb1, kw2, kb2 = jax.random.split(key, 5)

    x = jax.random.normal(kx, (batch, state_dim), dtype=jnp.float32)

    # PyTorch Linear weight is (out, in); stored pre-transposed as (in, out).
    w1 = jax.random.normal(kw1, (state_dim, hidden_dim), dtype=jnp.float32) * 0.1
    b1 = jax.random.normal(kb1, (hidden_dim,), dtype=jnp.float32) * 0.1
    w2 = jax.random.normal(kw2, (hidden_dim, action_dim), dtype=jnp.float32) * 0.1
    b2 = jax.random.normal(kb2, (action_dim,), dtype=jnp.float32) * 0.1

    # One-time weight preprocessing, hoisted out of the per-call forward.
    params = jax.block_until_ready(prepare_policy_params(w1, b1, w2, b2))

    probs = policy_net_forward(x, params, action_dim=action_dim)
    probs = jax.block_until_ready(probs)

    ref = _reference(x, w1, b1, w2, b2)
    assert probs.shape == (batch, action_dim)
    # bf16 MXU operands introduce small deviations vs. the pure-f32 reference.
    assert jnp.allclose(probs, ref, atol=2e-2), "mismatch vs reference"
    # Exact (non-approx) divide: rows sum to 1 to f32 precision.
    assert jnp.allclose(jnp.sum(probs, axis=1), 1.0, atol=1e-4)

    # Second check: non-multiple batch with small tiles -> multi-tile grid and
    # the batch-padding / output-slicing path.
    batch2 = 37
    x2 = jax.random.normal(jax.random.PRNGKey(1), (batch2, state_dim), jnp.float32)
    probs2 = jax.block_until_ready(
        policy_net_forward(x2, params, action_dim=action_dim, tb=16))
    ref2 = _reference(x2, w1, b1, w2, b2)
    assert probs2.shape == (batch2, action_dim)
    assert jnp.allclose(probs2, ref2, atol=2e-2), "mismatch vs reference (tiled)"
    assert jnp.allclose(jnp.sum(probs2, axis=1), 1.0, atol=1e-4)

    print("KERNEL_OK")
</pallas_src>

<mosaic_0001>
module attributes {stable_mosaic.version = 11 : i64} {
  func.func @policy_net_kernel(%arg0: i32, %arg1: memref<16x16xf32, #tpu.memory_space<vmem>>, %arg2: memref<16x32xbf16, #tpu.memory_space<vmem>>, %arg3: memref<1x32xf32, #tpu.memory_space<vmem>>, %arg4: memref<32x128xbf16, #tpu.memory_space<vmem>>, %arg5: memref<1x128xf32, #tpu.memory_space<vmem>>, %arg6: memref<16x4xf32, #tpu.memory_space<vmem>>) attributes {dimension_semantics = [#tpu.dimension_semantics<parallel>], iteration_bounds = array<i64: 1>, scalar_prefetch = 0 : i64, scratch_operands = 0 : i64, tpu.core_type = #tpu.core_type<tc>, window_params = [{transform_indices = @transform_0, window_bounds = array<i64: 16, 16>}, {pipeline_mode = #tpu.pipeline_mode<synchronous>, transform_indices = @transform_1, window_bounds = array<i64: 16, 32>}, {pipeline_mode = #tpu.pipeline_mode<synchronous>, transform_indices = @transform_2, window_bounds = array<i64: 1, 32>}, {pipeline_mode = #tpu.pipeline_mode<synchronous>, transform_indices = @transform_3, window_bounds = array<i64: 32, 128>}, {pipeline_mode = #tpu.pipeline_mode<synchronous>, transform_indices = @transform_4, window_bounds = array<i64: 1, 128>}, {transform_indices = @transform_5, window_bounds = array<i64: 16, 4>}]} {
    %c0 = arith.constant 0 : index
    %c0_0 = arith.constant 0 : index
    %0 = vector.load %arg1[%c0, %c0_0] : memref<16x16xf32, #tpu.memory_space<vmem>>, vector<16x16xf32>
    %1 = arith.truncf %0 : vector<16x16xf32> to vector<16x16xbf16>
    %c0_1 = arith.constant 0 : index
    %c0_2 = arith.constant 0 : index
    %2 = vector.load %arg2[%c0_1, %c0_2] : memref<16x32xbf16, #tpu.memory_space<vmem>>, vector<16x32xbf16>
    %cst = arith.constant dense<0.000000e+00> : vector<16x32xf32>
    %3 = tpu.matmul %1, %2, %cst {dimension_numbers = #tpu.dot_dimension_numbers<[1], [0], [0], [1], [0, 0, 1, 1], [], []>} : vector<16x16xbf16>, vector<16x32xbf16>, vector<16x32xf32> -> vector<16x32xf32>
    %c0_3 = arith.constant 0 : index
    %c0_4 = arith.constant 0 : index
    %4 = vector.load %arg3[%c0_3, %c0_4] : memref<1x32xf32, #tpu.memory_space<vmem>>, vector<1x32xf32>
    %5 = vector.broadcast %4 : vector<1x32xf32> to vector<16x32xf32>
    %6 = arith.addf %3, %5 : vector<16x32xf32>
    %cst_5 = arith.constant 0.000000e+00 : f32
    %7 = vector.broadcast %cst_5 : f32 to vector<16x32xf32>
    %8 = arith.maximumf %6, %7 : vector<16x32xf32>
    %9 = arith.truncf %8 : vector<16x32xf32> to vector<16x32xbf16>
    %c0_6 = arith.constant 0 : index
    %c0_7 = arith.constant 0 : index
    %10 = vector.load %arg4[%c0_6, %c0_7] : memref<32x128xbf16, #tpu.memory_space<vmem>>, vector<32x128xbf16>
    %cst_8 = arith.constant dense<0.000000e+00> : vector<16x128xf32>
    %11 = tpu.matmul %9, %10, %cst_8 {dimension_numbers = #tpu.dot_dimension_numbers<[1], [0], [0], [1], [0, 0, 1, 1], [], []>} : vector<16x32xbf16>, vector<32x128xbf16>, vector<16x128xf32> -> vector<16x128xf32>
    %c0_9 = arith.constant 0 : index
    %c0_10 = arith.constant 0 : index
    %12 = vector.load %arg5[%c0_9, %c0_10] : memref<1x128xf32, #tpu.memory_space<vmem>>, vector<1x128xf32>
    %13 = vector.broadcast %12 : vector<1x128xf32> to vector<16x128xf32>
    %14 = arith.addf %11, %13 : vector<16x128xf32>
    %cst_11 = arith.constant dense<0xFF800000> : vector<16xf32>
    %15 = vector.multi_reduction <maximumf>, %14, %cst_11 [1] : vector<16x128xf32> to vector<16xf32>
    %16 = vector.shape_cast %15 : vector<16xf32> to vector<16x1xf32>
    %17 = vector.broadcast %16 : vector<16x1xf32> to vector<16x128xf32>
    %18 = arith.subf %14, %17 : vector<16x128xf32>
    %19 = math.exp %18 : vector<16x128xf32>
    %cst_12 = arith.constant dense<0.000000e+00> : vector<16xf32>
    %20 = vector.multi_reduction <add>, %19, %cst_12 [1] : vector<16x128xf32> to vector<16xf32>
    %21 = vector.shape_cast %20 : vector<16xf32> to vector<16x1xf32>
    %22 = vector.broadcast %21 : vector<16x1xf32> to vector<16x128xf32>
    %23 = arith.divf %19, %22 : vector<16x128xf32>
    %24 = vector.extract_strided_slice %23 {offsets = [0, 0], sizes = [16, 4], strides = [1, 1]} : vector<16x128xf32> to vector<16x4xf32>
    %c0_13 = arith.constant 0 : index
    %c0_14 = arith.constant 0 : index
    %25 = vector.load %arg6[%c0_13, %c0_14] : memref<16x4xf32, #tpu.memory_space<vmem>>, vector<16x4xf32>
    tpu.vector_store %arg6[%c0_13, %c0_14], %24 {strides = array<i32>} : memref<16x4xf32, #tpu.memory_space<vmem>>, vector<16x4xf32>,
    return
  }
  func.func @transform_0(%arg0: i32) -> (i32, i32) {
    %c0_i32 = arith.constant 0 : i32
    %c0_i32_0 = arith.constant 0 : i32
    return %arg0, %c0_i32 : i32, i32
  }
  func.func @transform_1(%arg0: i32) -> (i32, i32) {
    %c0_i32 = arith.constant 0 : i32
    %c0_i32_0 = arith.constant 0 : i32
    %c0_i32_1 = arith.constant 0 : i32
    return %c0_i32, %c0_i32_0 : i32, i32
  }
  func.func @transform_2(%arg0: i32) -> (i32, i32) {
    %c0_i32 = arith.constant 0 : i32
    %c0_i32_0 = arith.constant 0 : i32
    %c0_i32_1 = arith.constant 0 : i32
    return %c0_i32, %c0_i32_0 : i32, i32
  }
  func.func @transform_3(%arg0: i32) -> (i32, i32) {
    %c0_i32 = arith.constant 0 : i32
    %c0_i32_0 = arith.constant 0 : i32
    %c0_i32_1 = arith.constant 0 : i32
    return %c0_i32, %c0_i32_0 : i32, i32
  }
  func.func @transform_4(%arg0: i32) -> (i32, i32) {
    %c0_i32 = arith.constant 0 : i32
    %c0_i32_0 = arith.constant 0 : i32
    %c0_i32_1 = arith.constant 0 : i32
    return %c0_i32, %c0_i32_0 : i32, i32
  }
  func.func @transform_5(%arg0: i32) -> (i32, i32) {
    %c0_i32 = arith.constant 0 : i32
    %c0_i32_0 = arith.constant 0 : i32
    return %arg0, %c0_i32 : i32, i32
  }
}

</mosaic_0001>

<llo_original>
// kernel: policy_net_forward.1
$region0: #{policy_net_forward.1}
  #allocation0 [shape = 'u32[]', space=smem, size = 0x4, offset = 0x4, fixed_abs, tag = 'smem constant byte address 0x4 - core index']
  #allocation1 [shape = 'u32[144,128]{1,0:T(1,128)}', space=vmem, size = 0x12000, scoped, tag = 'internal scratch']
  %s0 = inlined_call_operand.vmem [shape: f32[16,16], index: 0, kind: input, shape index: {}]
  %s1 = inlined_call_operand.vmem [shape: bf16[16,32], index: 1, kind: input, shape index: {}]
  %s2 = inlined_call_operand.vmem [shape: f32[1,32], index: 2, kind: input, shape index: {}]
  %s3 = inlined_call_operand.vmem [shape: bf16[32,128], index: 3, kind: input, shape index: {}]
  %s4 = inlined_call_operand.vmem [shape: f32[1,128], index: 4, kind: input, shape index: {}]
  %s5 = inlined_call_operand.vmem [shape: f32[16,4], index: 5, kind: output, shape index: {}]
  %s6 = sld [smem:[#allocation0]]
  $region30: #{policy_net_forward.1} parent=0
    _
  %s8 = ssub.s32 1, %s6
  %s9 = scalar_select 0, %s8, %s6
  // Predicated region
  $region2: #{policy_net_forward.1} parent=0 // pred_check
    _
  $region3: #{policy_net_forward.1} parent=0 // pred_check_branch
    %11 = sbr.rel (0) target = $region5
  $region4: #{policy_net_forward.1} parent=0 // pred_region
    _
  $region5: #{policy_net_forward.1} parent=0 // pred_fallthru
    _
  // Predicated region
  $region6: #{policy_net_forward.1} parent=0 // pred_check
    _
  $region7: #{policy_net_forward.1} parent=0 // pred_check_branch
    %13 = sbr.rel (0) target = $region9
  $region8: #{policy_net_forward.1} parent=0 // pred_region
    _
  $region9: #{policy_net_forward.1} parent=0 // pred_fallthru
    _
  // Predicated region
  $region10: #{policy_net_forward.1} parent=0 // pred_check
    _
  $region11: #{policy_net_forward.1} parent=0 // pred_check_branch
    %15 = sbr.rel (0) target = $region13
  $region12: #{policy_net_forward.1} parent=0 // pred_region
    _
  $region13: #{policy_net_forward.1} parent=0 // pred_fallthru
    _
  // Predicated region
  $region14: #{policy_net_forward.1} parent=0 // pred_check
    _
  $region15: #{policy_net_forward.1} parent=0 // pred_check_branch
    %17 = sbr.rel (0) target = $region17
  $region16: #{policy_net_forward.1} parent=0 // pred_region
    _
  $region17: #{policy_net_forward.1} parent=0 // pred_fallthru
    _
  // Predicated region
  $region18: #{policy_net_forward.1} parent=0 // pred_check
    _
  $region19: #{policy_net_forward.1} parent=0 // pred_check_branch
    %19 = sbr.rel (0) target = $region21
  $region20: #{policy_net_forward.1} parent=0 // pred_region
    _
  $region21: #{policy_net_forward.1} parent=0 // pred_fallthru
    _
  %v21 = vld [vmem:[%s0] sm:$0xff]
  %v22 = vld [vmem:[%s0 + $0x8] sm:$0xff]
  %v23 = vpack.c.bf16 %v22, %v21
  %v24 = vld [vmem:[%s1] sm:$0xf]
  %v25 = vld [vmem:[%s1 + $0x4] sm:$0xf]
  %v26 = vld [vmem:[%s2] sm:$0x1]
  %v28 = vlaneseq
  %v29 = vshrl.u32 %v28, 7
  %v30 = vsub.s32 0, %v29
  %v31 = vrot.slane %v26, %v30
  %v35 = vunpack.c.l.b16 %v24
  %v36 = vunpack.c.l.b16 %v25
  %v37 = vpack.c.b16 %v36, %v35
  %vm39 = vcmask 130048
  %v41 = vsel %vm39, %v23, 0
  %43 = vmatprep.subr.bf16.mxu0 0
  %44 = vmatpush1.bf16.msra.mxu0 %v37
  %45 = vmatprep.subr.bf16.mxu0 0
  %46 = vmatpush1.bf16.msra.mxu0 0
  %47 = vmatprep.subr.bf16.mxu0 0
  %48 = vmatpush1.bf16.msra.mxu0 0
  %49 = vmatprep.subr.bf16.mxu0 0
  %50 = vmatpush1.bf16.msra.mxu0 0
  %51 = vmatprep.subr.bf16.mxu0 0
  %52 = vmatpush1.bf16.msra.mxu0 0
  %53 = vmatprep.subr.bf16.mxu0 0
  %54 = vmatpush1.bf16.msra.mxu0 0
  %55 = vmatprep.subr.bf16.mxu0 0
  %56 = vmatpush1.bf16.msra.mxu0 0
  %57 = vmatprep.subr.bf16.mxu0 0
  %58 = vmatpush1.bf16.msra.mxu0 0
  %59 = vmatprep.subr.bf16.mxu0 0
  %60 = vmatpush1.bf16.msra.mxu0 0
  %61 = vmatprep.subr.bf16.mxu0 0
  %62 = vmatpush1.bf16.msra.mxu0 0
  %63 = vmatprep.subr.bf16.mxu0 0
  %64 = vmatpush1.bf16.msra.mxu0 0
  %65 = vmatprep.subr.bf16.mxu0 0
  %66 = vmatpush1.bf16.msra.mxu0 0
  %67 = vmatprep.subr.bf16.mxu0 0
  %68 = vmatpush1.bf16.msra.mxu0 0
  %69 = vmatprep.subr.bf16.mxu0 0
  %70 = vmatpush1.bf16.msra.mxu0 0
  %71 = vmatprep.subr.bf16.mxu0 0
  %72 = vmatpush1.bf16.msra.mxu0 0
  %73 = vmatprep.subr.bf16.mxu0 0
  %74 = vmatpush1.bf16.msra.mxu0 0
  %75 = vmatprep.mubr.bf16.mxu0 0
  %76 = vmatmul.mubr.bf16.gmra.mrb[0].mxu0 %v41
  %v77 = vpop.f32.mrb[0].mxu0
  %v78 = vadd.f32 %v31, %v77
  %v79 = vpop.f32.mrb[0].mxu0
  %v80 = vpop.f32.mrb[0].mxu0
  %v81 = vadd.f32 %v31, %v80
  %v82 = vpop.f32.mrb[0].mxu0
  %83 = vdwg.mxu0
  %v84 = vmax.f32 %v78, 0.0
  %v85 = vmax.f32 %v81, 0.0
  %v86 = vpack.c.bf16 %v85, %v84
  %v87 = vld [vmem:[%s3] sm:$0xf]
  %v88 = vld [vmem:[%s3 + $0x4] sm:$0xf]
  %v89 = vld [vmem:[%s3 + $0x8] sm:$0xf]
  %v90 = vld [vmem:[%s3 + $0xc] sm:$0xf]
  %v91 = vld [vmem:[%s4] sm:$0x1]
  %v93 = vlaneseq
  %v94 = vshrl.u32 %v93, 7
  %v95 = vsub.s32 0, %v94
  %v96 = vrot.slane %v91, %v95
  %v102 = vunpack.c.l.b16 %v87
  %v103 = vunpack.c.l.b16 %v88
  %v104 = vunpack.c.l.b16 %v89
  %v105 = vunpack.c.l.b16 %v90
  %v106 = vpack.c.b16 %v103, %v102
  %v107 = vpack.c.b16 %v105, %v104
  %vm110 = vcmask 261120
  %v112 = vsel %vm110, %v86, 0
  %114 = vmatprep.subr.bf16.mxu0 0
  %115 = vmatpush1.bf16.msra.mxu0 %v106
  %116 = vmatprep.subr.bf16.mxu0 0
  %117 = vmatpush1.bf16.msra.mxu0 %v107
  %118 = vmatprep.subr.bf16.mxu0 0
  %119 = vmatpush1.bf16.msra.mxu0 0
  %120 = vmatprep.subr.bf16.mxu0 0
  %121 = vmatpush1.bf16.msra.mxu0 0
  %122 = vmatprep.subr.bf16.mxu0 0
  %123 = vmatpush1.bf16.msra.mxu0 0
  %124 = vmatprep.subr.bf16.mxu0 0
  %125 = vmatpush1.bf16.msra.mxu0 0
  %126 = vmatprep.subr.bf16.mxu0 0
  %127 = vmatpush1.bf16.msra.mxu0 0
  %128 = vmatprep.subr.bf16.mxu0 0
  %129 = vmatpush1.bf16.msra.mxu0 0
  %130 = vmatprep.subr.bf16.mxu0 0
  %131 = vmatpush1.bf16.msra.mxu0 0
  %132 = vmatprep.subr.bf16.mxu0 0
  %133 = vmatpush1.bf16.msra.mxu0 0
  %134 = vmatprep.subr.bf16.mxu0 0
  %135 = vmatpush1.bf16.msra.mxu0 0
  %136 = vmatprep.subr.bf16.mxu0 0
  %137 = vmatpush1.bf16.msra.mxu0 0
  %138 = vmatprep.subr.bf16.mxu0 0
  %139 = vmatpush1.bf16.msra.mxu0 0
  %140 = vmatprep.subr.bf16.mxu0 0
  %141 = vmatpush1.bf16.msra.mxu0 0
  %142 = vmatprep.subr.bf16.mxu0 0
  %143 = vmatpush1.bf16.msra.mxu0 0
  %144 = vmatprep.subr.bf16.mxu0 0
  %145 = vmatpush1.bf16.msra.mxu0 0
  %146 = vmatprep.mubr.bf16.mxu0 0
  %147 = vmatmul.mubr.bf16.gmra.mrb[0].mxu0 %v112
  %v148 = vpop.f32.mrb[0].mxu0
  %v149 = vadd.f32 %v96, %v148
  %v150 = vpop.f32.mrb[0].mxu0
  %v151 = vpop.f32.mrb[0].mxu0
  %v152 = vadd.f32 %v96, %v151
  %v153 = vpop.f32.mrb[0].mxu0
  %154 = vdwg.mxu0
  %155 = vmax.xlane.f32.xlu0 %v149
  %v156 = vpop.xlane.xlu0 %155
  %157 = vmax.xlane.f32.xlu0 %v152
  %v158 = vpop.xlane.xlu0 %157
  %v159 = vsub.f32 %v149, %v156
  %v160 = vsub.f32 %v152, %v158
  %v161 = vmul.f32 %v159, 1.442695
  %v162 = vpow.pop %v161
  %v163 = vmul.f32 %v160, 1.442695
  %v164 = vpow.pop %v163
  %165 = vadd.xlane.f32.xlu0 %v162
  %v166 = vpop.xlane.xlu0 %165
  %167 = vadd.xlane.f32.xlu0 %v164
  %v168 = vpop.xlane.xlu0 %167
  %v169 = vrcp.pop %v166
  %v170 = vmul.f32 %v162, %v169
  %v171 = vrcp.pop %v168
  %v172 = vmul.f32 %v164, %v171
  %vm173 = vcmask 31744
  %174 = vst.msk [vmem:[%s5] sm:$0xff] %vm173, %v170
  %175 = vst.msk [vmem:[%s5 + $0x8] sm:$0xff] %vm173, %v172
  // Predicated region
  $region22: #{policy_net_forward.1} parent=0 // pred_check
    _
  $region23: #{policy_net_forward.1} parent=0 // pred_check_branch
    %177 = sbr.rel (0) target = $region25
  $region24: #{policy_net_forward.1} parent=0 // pred_region
    _
  $region25: #{policy_net_forward.1} parent=0 // pred_fallthru
    _
  // Predicated region
  $region26: #{policy_net_forward.1} parent=0 // pred_check
    _
  $region27: #{policy_net_forward.1} parent=0 // pred_check_branch
    %179 = sbr.rel (0) target = $region29
  $region28: #{policy_net_forward.1} parent=0 // pred_region
    _
  $region29: #{policy_net_forward.1} parent=0 // pred_fallthru
    _

</llo_original>
